<compile_context>
chip_gen: v5e
topology: v5e:2x2
jax: 0.10.0
libtpu: 0.0.40
codegen_flags: <defaults>
</compile_context>

<pallas_src>
import functools

import jax
import jax.numpy as jnp
import numpy as np
from jax import lax
from jax.experimental import pallas as pl
from jax.experimental.pallas import tpu as pltpu

_BIG = 1e30   # sentinel; real squared distances are tiny compared to this
_EPS = 1e-16


def _round_up(x, m):
    return ((x + m - 1) // m) * m


def _loss_tile_kernel(lab_col_ref, lab_row_ref, sq_col_ref, sq_row_ref,
                      emb_ref, embt_ref, out_ref, trip_sref,
                      *, margin, b_real, cb, n_blocks):
    i = pl.program_id(0)

    e_tile = emb_ref[...]                     # (tm, D)   anchor rows of this tile
    e_t = embt_ref[...]                       # (D, B_pad) all embeddings, transposed
    tm = e_tile.shape[0]
    b_pad = e_t.shape[1]
    i0 = i * tm                               # first global row of this tile

    # ---- pairwise squared distances for this row tile (tm, B_pad) ----------
    gram = jnp.dot(e_tile, e_t, preferred_element_type=jnp.float32)   # MXU
    sq_c = sq_col_ref[...]                    # (tm, 1)  precomputed in wrapper
    sq_r = sq_row_ref[...]                    # (1, B_pad)

    row_ids = i0 + lax.broadcasted_iota(jnp.int32, (tm, 1), 0)
    lane_ids = lax.broadcasted_iota(jnp.int32, (tm, b_pad), 1)
    diag = row_ids == lane_ids
    invalid_col = lane_ids >= b_real          # padded columns (static compare)
    row_valid = row_ids < b_real              # padded anchor rows

    # clamp-at-zero / error-mask / zero-diagonal folded into one select
    pdist = jnp.where(diag, 0.0, jnp.maximum(sq_c + sq_r - 2.0 * gram, 0.0))

    # ---- adjacency-derived masks (only pdist/neg_cand/pos_f live past here) -
    adj = lab_col_ref[...] == lab_row_ref[...]                        # (tm, B_pad)
    neg_bad = jnp.logical_or(adj, invalid_col)
    neg_cand = jnp.where(neg_bad, _BIG, pdist)                        # candidate negatives
    pos_f = jnp.where(jnp.logical_or(jnp.logical_or(diag, invalid_col),
                                     jnp.logical_not(adj)), 0.0, 1.0)
    pos_f = jnp.where(row_valid, pos_f, 0.0)                          # (tm, B_pad)

    # ---- GOR partial sums (gram not needed after this) ----------------------
    # padded rows/cols have zero embeddings -> gram == 0 -> no contribution
    ff = jnp.where(adj, 0.0, gram)
    sum_ff = jnp.sum(ff)
    sum_ff2 = jnp.sum(ff * ff)
    cnt_ff = jnp.sum((ff > _EPS).astype(jnp.float32))
    npos = jnp.sum(pos_f)

    # ---- b-invariant fallback negative: largest negative distance ----------
    rowmin = jnp.min(pdist, axis=1, keepdims=True)      # == 0 (kept for parity w/ ref)
    neg_mask_f = jnp.where(neg_bad, 0.0, 1.0)
    neg_inside = jnp.max((pdist - rowmin) * neg_mask_f, axis=1, keepdims=True) + rowmin

    # ---- column loop over "positive" columns, blocked by 128 lanes ----------
    trip_sref[0] = jnp.float32(0.0)
    blk_iota = lax.broadcasted_iota(jnp.int32, (cb, 1), 0)            # hoisted
    unroll = True if cb <= 16 else 2   # sweep 2/4; unroll=8 raises spill pressure

    for j in range(n_blocks):          # static; block slices are lane-aligned views
        lo = j * cb
        t_blk = pdist[:, lo:lo + cb]   # (tm, cb) thresholds for these columns
        p_blk = pos_f[:, lo:lo + cb]   # (tm, cb) positive-mask columns
        tp_blk = jnp.concatenate([t_blk, p_blk], axis=0)              # (2*tm, cb)
        has_pos = jnp.sum(p_blk)

        @pl.when(has_pos > 0.0)        # skip blocks with no positives in this tile
        def _():
            def body(c, acc):
                onehot = (blk_iota == c).astype(jnp.float32)          # (cb, 1)
                tp = jnp.dot(tp_blk, onehot,
                             preferred_element_type=jnp.float32)      # (2*tm, 1) MXU
                t_col = tp[:tm, :]     # pdist[:, lo + c]  (exact)
                p_col = tp[tm:, :]     # pos_f[:, lo + c]  (exact 0/1)
                # semi-hard: min over negatives with d(a,n) > d(a,p); fall back
                # to the largest negative distance if none exists.
                cand = jnp.where(pdist > t_col, neg_cand, _BIG)
                neg_out = jnp.min(cand, axis=1, keepdims=True)
                shn = jnp.where(neg_out < _BIG, neg_out, neg_inside)
                loss_col = jnp.maximum(margin + t_col - shn, 0.0)
                return acc + p_col * loss_col

            blk_acc = lax.fori_loop(0, cb, body,
                                    jnp.zeros((tm, 1), jnp.float32),
                                    unroll=unroll)
            trip_sref[0] = trip_sref[0] + jnp.sum(blk_acc)

    # ---- per-tile partial sums -> one lane-dense (8,128) output block -------
    sub = lax.broadcasted_iota(jnp.int32, (8, 128), 0)
    lane = lax.broadcasted_iota(jnp.int32, (8, 128), 1)
    idx = sub * 128 + lane
    row = jnp.where(idx == 0, trip_sref[0], 0.0)
    row = row + jnp.where(idx == 1, npos, 0.0)
    row = row + jnp.where(idx == 2, sum_ff, 0.0)
    row = row + jnp.where(idx == 3, sum_ff2, 0.0)
    row = row + jnp.where(idx == 4, cnt_ff, 0.0)
    out_ref[...] = row


def semihard_triplet_loss_with_gor(embeddings, labels, margin=1.0, alpha_gor=1.0):
    """embeddings: [B, D] float, labels: [B] int. Returns scalar f32 loss."""
    emb = embeddings.astype(jnp.float32)
    b_real, d = emb.shape
    lab = labels.astype(jnp.int32)

    # ---- pad ragged batches; padded rows/cols are masked inside the kernel --
    if b_real <= 128:
        b_pad = max(_round_up(b_real, 8), 8)
        tm = b_pad
    else:
        tm = 128
        b_pad = _round_up(b_real, 128)
    pad = b_pad - b_real
    if pad:
        emb = jnp.pad(emb, ((0, pad), (0, 0)))     # zero embeddings
        lab = jnp.pad(lab, ((0, pad),))            # label value irrelevant (masked)
    num_tiles = b_pad // tm
    cb = min(128, b_pad)                            # column-block width
    n_blocks = b_pad // cb

    # hoisted: squared norms computed once, passed as resident / tiled inputs
    sq = jnp.sum(emb * emb, axis=1)

    kernel = functools.partial(_loss_tile_kernel, margin=float(margin),
                               b_real=b_real, cb=cb, n_blocks=n_blocks)

    # explicit scoped-VMEM budget (v5e default is only 16 MiB); capped at the
    # smallest physical VMEM across generations (v7x: 64 MiB).
    # TODO(synk): for very large B on v7x, cast the resident e_t to bf16 or
    # column-tile it; kept all-f32 here to match the reference exactly.
    vmem_need = (2 * d * b_pad * 4 + 2 * tm * d * 4
                 + 10 * tm * b_pad * 4 + (4 << 20))
    vmem_limit = int(min(max(vmem_need, 32 << 20), 64 << 20))

    parts = pl.pallas_call(
        kernel,
        out_shape=jax.ShapeDtypeStruct((num_tiles * 8, 128), jnp.float32),
        grid=(num_tiles,),
        in_specs=[
            pl.BlockSpec((tm, 1), lambda i: (i, 0)),       # labels as column, tiled
            pl.BlockSpec((1, b_pad), lambda i: (0, 0)),    # labels as row, resident
            pl.BlockSpec((tm, 1), lambda i: (i, 0)),       # squared norms, tiled
            pl.BlockSpec((1, b_pad), lambda i: (0, 0)),    # squared norms, resident
            pl.BlockSpec((tm, d), lambda i: (i, 0)),       # anchor embedding row tile
            pl.BlockSpec((d, b_pad), lambda i: (0, 0)),    # transposed embeddings
        ],
        out_specs=pl.BlockSpec((8, 128), lambda i: (i, 0)),
        scratch_shapes=[pltpu.SMEM((1,), jnp.float32)],
        compiler_params=pltpu.CompilerParams(
            dimension_semantics=("parallel",),             # per-tile partials -> no carry
            vmem_limit_bytes=vmem_limit,
        ),
    )(lab.reshape(b_pad, 1), lab.reshape(1, b_pad),
      sq.reshape(b_pad, 1), sq.reshape(1, b_pad),
      emb, emb.T)

    # ---- final scalar combine in JAX (tiny) ---------------------------------
    s = jnp.sum(parts, axis=0)            # (128,): lanes 0..4 hold the partials
    # NOTE: degenerate batches (no positives / no ff>eps) give NaN, same as ref.
    triplet = s[0] / s[1]
    m1 = s[2] / s[4]
    m2 = s[3] / s[4]
    lgor = m1 * m1 + jnp.maximum(m2 - jnp.float32(1.0 / d), 0.0)
    return triplet + jnp.float32(alpha_gor) * lgor


def _reference(embeddings, labels, margin=1.0, alpha_gor=1.0):
    """Pure-JAX mirror of the PyTorch module, for a correctness check."""
    e = embeddings.astype(jnp.float32)
    B, D = e.shape
    adj = labels[:, None] == labels[None, :]
    adj_f = adj.astype(jnp.float32)
    adj_not_f = 1.0 - adj_f
    gram = e @ e.T
    sq = jnp.sum(e * e, axis=1)
    pdist = sq[:, None] + sq[None, :] - 2.0 * gram
    pdist = jnp.maximum(pdist, 0.0)
    pdist = pdist * (pdist > 0.0)
    pdist = pdist * (1.0 - jnp.eye(B))

    pdist_tile = jnp.tile(pdist, (B, 1))
    adj_not_tile = jnp.tile(adj_not_f, (B, 1))
    thresh = pdist.T.reshape(-1, 1)
    mask = adj_not_tile * (pdist_tile > thresh).astype(jnp.float32)
    mask_final = (jnp.sum(mask, axis=1) > 0.0).reshape(B, B).T
    axis_max = jnp.max(pdist_tile, axis=1, keepdims=True)
    masked_min = jnp.min((pdist_tile - axis_max) * mask, axis=1, keepdims=True) + axis_max
    neg_out = masked_min.reshape(B, B).T
    axis_min = jnp.min(pdist, axis=1, keepdims=True)
    masked_max = jnp.max((pdist - axis_min) * adj_not_f, axis=1, keepdims=True) + axis_min
    neg_in = jnp.tile(masked_max, (1, B))
    shn = jnp.where(mask_final, neg_out, neg_in)
    loss_mat = margin + pdist - shn
    mask_pos = adj_f - jnp.eye(B)
    num_pos = jnp.sum(mask_pos)
    triplet = jnp.sum(jnp.maximum(loss_mat * mask_pos, 0.0)) / num_pos

    ff = gram * adj_not_f
    n_ff = jnp.sum((ff > 1e-16).astype(jnp.float32))
    m1 = jnp.sum(ff) / n_ff
    m2 = jnp.sum(ff * ff) / n_ff
    lgor = m1 * m1 + jnp.maximum(m2 - 1.0 / D, 0.0)
    return triplet + alpha_gor * lgor


if __name__ == "__main__":
    key = jax.random.PRNGKey(0)
    k1, k2 = jax.random.split(key)

    # Case 1: small aligned batch.
    B, D = 8, 32
    emb = jax.random.normal(k1, (B, D), dtype=jnp.float32)
    emb = emb / jnp.linalg.norm(emb, axis=1, keepdims=True)   # ~L2-normalized
    labels = jnp.array([0, 1, 2, 3, 0, 1, 2, 3], dtype=jnp.int32)
    loss = semihard_triplet_loss_with_gor(emb, labels, margin=1.0, alpha_gor=1.0)
    loss = jax.block_until_ready(loss)
    ref = _reference(emb, labels, margin=1.0, alpha_gor=1.0)
    np.testing.assert_allclose(np.asarray(loss), np.asarray(ref), rtol=1e-3, atol=1e-3)

    # Case 2: ragged batch (exercises the padding/masking path).
    B2, D2 = 12, 32
    emb2 = jax.random.normal(k2, (B2, D2), dtype=jnp.float32)
    emb2 = emb2 / jnp.linalg.norm(emb2, axis=1, keepdims=True)
    labels2 = jnp.array([0, 0, 1, 1, 2, 2, 3, 3, 4, 4, 5, 5], dtype=jnp.int32)
    loss2 = jax.block_until_ready(
        semihard_triplet_loss_with_gor(emb2, labels2, margin=1.0, alpha_gor=1.0))
    ref2 = _reference(emb2, labels2, margin=1.0, alpha_gor=1.0)
    np.testing.assert_allclose(np.asarray(loss2), np.asarray(ref2), rtol=1e-3, atol=1e-3)

    print("KERNEL_OK")
</pallas_src>

<mosaic_0001>
module attributes {stable_mosaic.version = 11 : i64} {
  func.func @_loss_tile_kernel(%arg0: i32, %arg1: memref<8x1xi32, #tpu.memory_space<vmem>>, %arg2: memref<1x8xi32, #tpu.memory_space<vmem>>, %arg3: memref<8x1xf32, #tpu.memory_space<vmem>>, %arg4: memref<1x8xf32, #tpu.memory_space<vmem>>, %arg5: memref<8x32xf32, #tpu.memory_space<vmem>>, %arg6: memref<32x8xf32, #tpu.memory_space<vmem>>, %arg7: memref<8x128xf32, #tpu.memory_space<vmem>>, %arg8: memref<1xf32, #tpu.memory_space<smem>>) attributes {dimension_semantics = [#tpu.dimension_semantics<parallel>], iteration_bounds = array<i64: 1>, scalar_prefetch = 0 : i64, scratch_operands = 1 : i64, tpu.core_type = #tpu.core_type<tc>, window_params = [{transform_indices = @transform_0, window_bounds = array<i64: 8, 1>}, {pipeline_mode = #tpu.pipeline_mode<synchronous>, transform_indices = @transform_1, window_bounds = array<i64: 1, 8>}, {transform_indices = @transform_2, window_bounds = array<i64: 8, 1>}, {pipeline_mode = #tpu.pipeline_mode<synchronous>, transform_indices = @transform_3, window_bounds = array<i64: 1, 8>}, {transform_indices = @transform_4, window_bounds = array<i64: 8, 32>}, {pipeline_mode = #tpu.pipeline_mode<synchronous>, transform_indices = @transform_5, window_bounds = array<i64: 32, 8>}, {transform_indices = @transform_6, window_bounds = array<i64: 8, 128>}]} {
    %c0 = arith.constant 0 : index
    %c0_0 = arith.constant 0 : index
    %0 = vector.load %arg5[%c0, %c0_0] : memref<8x32xf32, #tpu.memory_space<vmem>>, vector<8x32xf32>
    %c0_1 = arith.constant 0 : index
    %c0_2 = arith.constant 0 : index
    %1 = vector.load %arg6[%c0_1, %c0_2] : memref<32x8xf32, #tpu.memory_space<vmem>>, vector<32x8xf32>
    %c8_i32 = arith.constant 8 : i32
    %2 = arith.muli %arg0, %c8_i32 : i32
    %cst = arith.constant dense<0.000000e+00> : vector<8x8xf32>
    %3 = tpu.matmul %0, %1, %cst {dimension_numbers = #tpu.dot_dimension_numbers<[1], [0], [0], [1], [0, 0, 1, 1], [], []>} : vector<8x32xf32>, vector<32x8xf32>, vector<8x8xf32> -> vector<8x8xf32>
    %c0_3 = arith.constant 0 : index
    %c0_4 = arith.constant 0 : index
    %4 = vector.load %arg3[%c0_3, %c0_4] : memref<8x1xf32, #tpu.memory_space<vmem>>, vector<8x1xf32>
    %c0_5 = arith.constant 0 : index
    %c0_6 = arith.constant 0 : index
    %5 = vector.load %arg4[%c0_5, %c0_6] : memref<1x8xf32, #tpu.memory_space<vmem>>, vector<1x8xf32>
    %6 = tpu.iota {dimensions = array<i32: 0>} : vector<8x1xi32>
    %7 = vector.broadcast %2 : i32 to vector<8x1xi32>
    %8 = arith.addi %7, %6 : vector<8x1xi32>
    %9 = tpu.iota {dimensions = array<i32: 1>} : vector<8x8xi32>
    %10 = vector.broadcast %8 : vector<8x1xi32> to vector<8x8xi32>
    %11 = arith.cmpi eq, %10, %9 : vector<8x8xi32>
    %c8_i32_7 = arith.constant 8 : i32
    %12 = vector.broadcast %c8_i32_7 : i32 to vector<8x8xi32>
    %13 = arith.cmpi sge, %9, %12 : vector<8x8xi32>
    %c8_i32_8 = arith.constant 8 : i32
    %14 = vector.broadcast %c8_i32_8 : i32 to vector<8x1xi32>
    %15 = arith.cmpi slt, %8, %14 : vector<8x1xi32>
    %16 = vector.broadcast %4 : vector<8x1xf32> to vector<8x8xf32>
    %17 = vector.broadcast %5 : vector<1x8xf32> to vector<8x8xf32>
    %18 = arith.addf %16, %17 : vector<8x8xf32>
    %cst_9 = arith.constant 2.000000e+00 : f32
    %19 = vector.broadcast %cst_9 : f32 to vector<8x8xf32>
    %20 = arith.mulf %19, %3 : vector<8x8xf32>
    %21 = arith.subf %18, %20 : vector<8x8xf32>
    %cst_10 = arith.constant 0.000000e+00 : f32
    %22 = vector.broadcast %cst_10 : f32 to vector<8x8xf32>
    %23 = arith.maximumf %21, %22 : vector<8x8xf32>
    %cst_11 = arith.constant 0.000000e+00 : f32
    %24 = vector.broadcast %cst_11 : f32 to vector<8x8xf32>
    %25 = arith.select %11, %24, %23 : vector<8x8xi1>, vector<8x8xf32>
    %c0_12 = arith.constant 0 : index
    %c0_13 = arith.constant 0 : index
    %26 = vector.load %arg1[%c0_12, %c0_13] : memref<8x1xi32, #tpu.memory_space<vmem>>, vector<8x1xi32>
    %c0_14 = arith.constant 0 : index
    %c0_15 = arith.constant 0 : index
    %27 = vector.load %arg2[%c0_14, %c0_15] : memref<1x8xi32, #tpu.memory_space<vmem>>, vector<1x8xi32>
    %28 = vector.broadcast %26 : vector<8x1xi32> to vector<8x8xi32>
    %29 = vector.broadcast %27 : vector<1x8xi32> to vector<8x8xi32>
    %30 = arith.cmpi eq, %28, %29 : vector<8x8xi32>
    %31 = arith.ori %30, %13 : vector<8x8xi1>
    %cst_16 = arith.constant 1.000000e+30 : f32
    %32 = vector.broadcast %cst_16 : f32 to vector<8x8xf32>
    %33 = arith.select %31, %32, %25 : vector<8x8xi1>, vector<8x8xf32>
    %34 = arith.ori %11, %13 : vector<8x8xi1>
    %cst_17 = arith.constant dense<true> : vector<8x8xi1>
    %35 = arith.xori %30, %cst_17 : vector<8x8xi1>
    %36 = arith.ori %34, %35 : vector<8x8xi1>
    %cst_18 = arith.constant 0.000000e+00 : f32
    %cst_19 = arith.constant 1.000000e+00 : f32
    %37 = vector.broadcast %cst_18 : f32 to vector<8x8xf32>
    %38 = vector.broadcast %cst_19 : f32 to vector<8x8xf32>
    %39 = arith.select %36, %37, %38 : vector<8x8xi1>, vector<8x8xf32>
    %cst_20 = arith.constant 0.000000e+00 : f32
    %40 = vector.shape_cast %15 : vector<8x1xi1> to vector<8x1xi1>
    %41 = vector.broadcast %40 : vector<8x1xi1> to vector<8x8xi1>
    %42 = vector.broadcast %cst_20 : f32 to vector<8x8xf32>
    %43 = arith.select %41, %39, %42 : vector<8x8xi1>, vector<8x8xf32>
    %cst_21 = arith.constant 0.000000e+00 : f32
    %44 = vector.broadcast %cst_21 : f32 to vector<8x8xf32>
    %45 = arith.select %30, %44, %3 : vector<8x8xi1>, vector<8x8xf32>
    %46 = vector.shape_cast %45 : vector<8x8xf32> to vector<1x8x8xf32>
    %cst_22 = arith.constant dense<0.000000e+00> : vector<1xf32>
    %47 = vector.multi_reduction <add>, %46, %cst_22 [1, 2] : vector<1x8x8xf32> to vector<1xf32>
    %48 = vector.shape_cast %47 : vector<1xf32> to vector<1x1x1xf32>
    %49 = vector.extract %48[0, 0, 0] : f32 from vector<1x1x1xf32>
    %50 = arith.mulf %45, %45 : vector<8x8xf32>
    %51 = vector.shape_cast %50 : vector<8x8xf32> to vector<1x8x8xf32>
    %cst_23 = arith.constant dense<0.000000e+00> : vector<1xf32>
    %52 = vector.multi_reduction <add>, %51, %cst_23 [1, 2] : vector<1x8x8xf32> to vector<1xf32>
    %53 = vector.shape_cast %52 : vector<1xf32> to vector<1x1x1xf32>
    %54 = vector.extract %53[0, 0, 0] : f32 from vector<1x1x1xf32>
    %cst_24 = arith.constant 1.000000e-16 : f32
    %55 = vector.broadcast %cst_24 : f32 to vector<8x8xf32>
    %56 = arith.cmpf ogt, %45, %55 : vector<8x8xf32>
    %57 = arith.extui %56 : vector<8x8xi1> to vector<8x8xi32>
    %58 = arith.sitofp %57 : vector<8x8xi32> to vector<8x8xf32>
    %59 = vector.shape_cast %58 : vector<8x8xf32> to vector<1x8x8xf32>
    %cst_25 = arith.constant dense<0.000000e+00> : vector<1xf32>
    %60 = vector.multi_reduction <add>, %59, %cst_25 [1, 2] : vector<1x8x8xf32> to vector<1xf32>
    %61 = vector.shape_cast %60 : vector<1xf32> to vector<1x1x1xf32>
    %62 = vector.extract %61[0, 0, 0] : f32 from vector<1x1x1xf32>
    %63 = vector.shape_cast %43 : vector<8x8xf32> to vector<1x8x8xf32>
    %cst_26 = arith.constant dense<0.000000e+00> : vector<1xf32>
    %64 = vector.multi_reduction <add>, %63, %cst_26 [1, 2] : vector<1x8x8xf32> to vector<1xf32>
    %65 = vector.shape_cast %64 : vector<1xf32> to vector<1x1x1xf32>
    %66 = vector.extract %65[0, 0, 0] : f32 from vector<1x1x1xf32>
    %cst_27 = arith.constant dense<0x7F800000> : vector<8xf32>
    %67 = vector.multi_reduction <minimumf>, %25, %cst_27 [1] : vector<8x8xf32> to vector<8xf32>
    %68 = vector.shape_cast %67 : vector<8xf32> to vector<8x1xf32>
    %cst_28 = arith.constant 0.000000e+00 : f32
    %cst_29 = arith.constant 1.000000e+00 : f32
    %69 = vector.broadcast %cst_28 : f32 to vector<8x8xf32>
    %70 = vector.broadcast %cst_29 : f32 to vector<8x8xf32>
    %71 = arith.select %31, %69, %70 : vector<8x8xi1>, vector<8x8xf32>
    %72 = vector.broadcast %68 : vector<8x1xf32> to vector<8x8xf32>
    %73 = arith.subf %25, %72 : vector<8x8xf32>
    %74 = arith.mulf %73, %71 : vector<8x8xf32>
    %cst_30 = arith.constant dense<0xFF800000> : vector<8xf32>
    %75 = vector.multi_reduction <maximumf>, %74, %cst_30 [1] : vector<8x8xf32> to vector<8xf32>
    %76 = vector.shape_cast %75 : vector<8xf32> to vector<8x1xf32>
    %77 = arith.addf %76, %68 : vector<8x1xf32>
    %cst_31 = arith.constant 0.000000e+00 : f32
    %c0_32 = arith.constant 0 : index
    %78 = memref.load %arg8[%c0_32] : memref<1xf32, #tpu.memory_space<smem>>
    memref.store %cst_31, %arg8[%c0_32] : memref<1xf32, #tpu.memory_space<smem>>
    %79 = tpu.iota {dimensions = array<i32: 0>} : vector<8x1xi32>
    %80 = tpu.concatenate %25, %43 in 0 : vector<8x8xf32>, vector<8x8xf32> -> vector<16x8xf32>
    %81 = vector.shape_cast %43 : vector<8x8xf32> to vector<1x8x8xf32>
    %cst_33 = arith.constant dense<0.000000e+00> : vector<1xf32>
    %82 = vector.multi_reduction <add>, %81, %cst_33 [1, 2] : vector<1x8x8xf32> to vector<1xf32>
    %83 = vector.shape_cast %82 : vector<1xf32> to vector<1x1x1xf32>
    %84 = vector.extract %83[0, 0, 0] : f32 from vector<1x1x1xf32>
    %cst_34 = arith.constant 0.000000e+00 : f32
    %85 = arith.cmpf ogt, %84, %cst_34 : f32
    %86 = arith.extui %85 : i1 to i32
    %c0_i32 = arith.constant 0 : i32
    %87 = arith.cmpi ne, %86, %c0_i32 : i32
    scf.if %87 {
      %cst_44 = arith.constant 0.000000e+00 : f32
      %124 = vector.broadcast %cst_44 : f32 to vector<8x1xf32>
      %c0_i32_45 = arith.constant 0 : i32
      %125 = vector.broadcast %c0_i32_45 : i32 to vector<8x1xi32>
      %126 = arith.cmpi eq, %79, %125 : vector<8x1xi32>
      %127 = arith.extui %126 : vector<8x1xi1> to vector<8x1xi32>
      %128 = arith.sitofp %127 : vector<8x1xi32> to vector<8x1xf32>
      %cst_46 = arith.constant dense<0.000000e+00> : vector<16x1xf32>
      %129 = tpu.matmul %80, %128, %cst_46 {dimension_numbers = #tpu.dot_dimension_numbers<[1], [0], [0], [1], [0, 0, 1, 1], [], []>} : vector<16x8xf32>, vector<8x1xf32>, vector<16x1xf32> -> vector<16x1xf32>
      %130 = vector.extract_strided_slice %129 {offsets = [0, 0], sizes = [8, 1], strides = [1, 1]} : vector<16x1xf32> to vector<8x1xf32>
      %131 = vector.extract_strided_slice %129 {offsets = [8, 0], sizes = [8, 1], strides = [1, 1]} : vector<16x1xf32> to vector<8x1xf32>
      %132 = vector.broadcast %130 : vector<8x1xf32> to vector<8x8xf32>
      %133 = arith.cmpf ogt, %25, %132 : vector<8x8xf32>
      %cst_47 = arith.constant 1.000000e+30 : f32
      %134 = vector.broadcast %cst_47 : f32 to vector<8x8xf32>
      %135 = arith.select %133, %33, %134 : vector<8x8xi1>, vector<8x8xf32>
      %cst_48 = arith.constant dense<0x7F800000> : vector<8xf32>
      %136 = vector.multi_reduction <minimumf>, %135, %cst_48 [1] : vector<8x8xf32> to vector<8xf32>
      %137 = vector.shape_cast %136 : vector<8xf32> to vector<8x1xf32>
      %cst_49 = arith.constant 1.000000e+30 : f32
      %138 = vector.broadcast %cst_49 : f32 to vector<8x1xf32>
      %139 = arith.cmpf olt, %137, %138 : vector<8x1xf32>
      %140 = arith.select %139, %137, %77 : vector<8x1xi1>, vector<8x1xf32>
      %cst_50 = arith.constant 1.000000e+00 : f32
      %141 = vector.broadcast %cst_50 : f32 to vector<8x1xf32>
      %142 = arith.addf %141, %130 : vector<8x1xf32>
      %143 = arith.subf %142, %140 : vector<8x1xf32>
      %cst_51 = arith.constant 0.000000e+00 : f32
      %144 = vector.broadcast %cst_51 : f32 to vector<8x1xf32>
      %145 = arith.maximumf %143, %144 : vector<8x1xf32>
      %146 = arith.mulf %131, %145 : vector<8x1xf32>
      %147 = arith.addf %124, %146 : vector<8x1xf32>
      %c1_i32_52 = arith.constant 1 : i32
      %148 = vector.broadcast %c1_i32_52 : i32 to vector<8x1xi32>
      %149 = arith.cmpi eq, %79, %148 : vector<8x1xi32>
      %150 = arith.extui %149 : vector<8x1xi1> to vector<8x1xi32>
      %151 = arith.sitofp %150 : vector<8x1xi32> to vector<8x1xf32>
      %cst_53 = arith.constant dense<0.000000e+00> : vector<16x1xf32>
      %152 = tpu.matmul %80, %151, %cst_53 {dimension_numbers = #tpu.dot_dimension_numbers<[1], [0], [0], [1], [0, 0, 1, 1], [], []>} : vector<16x8xf32>, vector<8x1xf32>, vector<16x1xf32> -> vector<16x1xf32>
      %153 = vector.extract_strided_slice %152 {offsets = [0, 0], sizes = [8, 1], strides = [1, 1]} : vector<16x1xf32> to vector<8x1xf32>
      %154 = vector.extract_strided_slice %152 {offsets = [8, 0], sizes = [8, 1], strides = [1, 1]} : vector<16x1xf32> to vector<8x1xf32>
      %155 = vector.broadcast %153 : vector<8x1xf32> to vector<8x8xf32>
      %156 = arith.cmpf ogt, %25, %155 : vector<8x8xf32>
      %cst_54 = arith.constant 1.000000e+30 : f32
      %157 = vector.broadcast %cst_54 : f32 to vector<8x8xf32>
      %158 = arith.select %156, %33, %157 : vector<8x8xi1>, vector<8x8xf32>
      %cst_55 = arith.constant dense<0x7F800000> : vector<8xf32>
      %159 = vector.multi_reduction <minimumf>, %158, %cst_55 [1] : vector<8x8xf32> to vector<8xf32>
      %160 = vector.shape_cast %159 : vector<8xf32> to vector<8x1xf32>
      %cst_56 = arith.constant 1.000000e+30 : f32
      %161 = vector.broadcast %cst_56 : f32 to vector<8x1xf32>
      %162 = arith.cmpf olt, %160, %161 : vector<8x1xf32>
      %163 = arith.select %162, %160, %77 : vector<8x1xi1>, vector<8x1xf32>
      %cst_57 = arith.constant 1.000000e+00 : f32
      %164 = vector.broadcast %cst_57 : f32 to vector<8x1xf32>
      %165 = arith.addf %164, %153 : vector<8x1xf32>
      %166 = arith.subf %165, %163 : vector<8x1xf32>
      %cst_58 = arith.constant 0.000000e+00 : f32
      %167 = vector.broadcast %cst_58 : f32 to vector<8x1xf32>
      %168 = arith.maximumf %166, %167 : vector<8x1xf32>
      %169 = arith.mulf %154, %168 : vector<8x1xf32>
      %170 = arith.addf %147, %169 : vector<8x1xf32>
      %c2_i32_59 = arith.constant 2 : i32
      %171 = vector.broadcast %c2_i32_59 : i32 to vector<8x1xi32>
      %172 = arith.cmpi eq, %79, %171 : vector<8x1xi32>
      %173 = arith.extui %172 : vector<8x1xi1> to vector<8x1xi32>
      %174 = arith.sitofp %173 : vector<8x1xi32> to vector<8x1xf32>
      %cst_60 = arith.constant dense<0.000000e+00> : vector<16x1xf32>
      %175 = tpu.matmul %80, %174, %cst_60 {dimension_numbers = #tpu.dot_dimension_numbers<[1], [0], [0], [1], [0, 0, 1, 1], [], []>} : vector<16x8xf32>, vector<8x1xf32>, vector<16x1xf32> -> vector<16x1xf32>
      %176 = vector.extract_strided_slice %175 {offsets = [0, 0], sizes = [8, 1], strides = [1, 1]} : vector<16x1xf32> to vector<8x1xf32>
      %177 = vector.extract_strided_slice %175 {offsets = [8, 0], sizes = [8, 1], strides = [1, 1]} : vector<16x1xf32> to vector<8x1xf32>
      %178 = vector.broadcast %176 : vector<8x1xf32> to vector<8x8xf32>
      %179 = arith.cmpf ogt, %25, %178 : vector<8x8xf32>
      %cst_61 = arith.constant 1.000000e+30 : f32
      %180 = vector.broadcast %cst_61 : f32 to vector<8x8xf32>
      %181 = arith.select %179, %33, %180 : vector<8x8xi1>, vector<8x8xf32>
      %cst_62 = arith.constant dense<0x7F800000> : vector<8xf32>
      %182 = vector.multi_reduction <minimumf>, %181, %cst_62 [1] : vector<8x8xf32> to vector<8xf32>
      %183 = vector.shape_cast %182 : vector<8xf32> to vector<8x1xf32>
      %cst_63 = arith.constant 1.000000e+30 : f32
      %184 = vector.broadcast %cst_63 : f32 to vector<8x1xf32>
      %185 = arith.cmpf olt, %183, %184 : vector<8x1xf32>
      %186 = arith.select %185, %183, %77 : vector<8x1xi1>, vector<8x1xf32>
      %cst_64 = arith.constant 1.000000e+00 : f32
      %187 = vector.broadcast %cst_64 : f32 to vector<8x1xf32>
      %188 = arith.addf %187, %176 : vector<8x1xf32>
      %189 = arith.subf %188, %186 : vector<8x1xf32>
      %cst_65 = arith.constant 0.000000e+00 : f32
      %190 = vector.broadcast %cst_65 : f32 to vector<8x1xf32>
      %191 = arith.maximumf %189, %190 : vector<8x1xf32>
      %192 = arith.mulf %177, %191 : vector<8x1xf32>
      %193 = arith.addf %170, %192 : vector<8x1xf32>
      %c3_i32_66 = arith.constant 3 : i32
      %194 = vector.broadcast %c3_i32_66 : i32 to vector<8x1xi32>
      %195 = arith.cmpi eq, %79, %194 : vector<8x1xi32>
      %196 = arith.extui %195 : vector<8x1xi1> to vector<8x1xi32>
      %197 = arith.sitofp %196 : vector<8x1xi32> to vector<8x1xf32>
      %cst_67 = arith.constant dense<0.000000e+00> : vector<16x1xf32>
      %198 = tpu.matmul %80, %197, %cst_67 {dimension_numbers = #tpu.dot_dimension_numbers<[1], [0], [0], [1], [0, 0, 1, 1], [], []>} : vector<16x8xf32>, vector<8x1xf32>, vector<16x1xf32> -> vector<16x1xf32>
      %199 = vector.extract_strided_slice %198 {offsets = [0, 0], sizes = [8, 1], strides = [1, 1]} : vector<16x1xf32> to vector<8x1xf32>
      %200 = vector.extract_strided_slice %198 {offsets = [8, 0], sizes = [8, 1], strides = [1, 1]} : vector<16x1xf32> to vector<8x1xf32>
      %201 = vector.broadcast %199 : vector<8x1xf32> to vector<8x8xf32>
      %202 = arith.cmpf ogt, %25, %201 : vector<8x8xf32>
      %cst_68 = arith.constant 1.000000e+30 : f32
      %203 = vector.broadcast %cst_68 : f32 to vector<8x8xf32>
      %204 = arith.select %202, %33, %203 : vector<8x8xi1>, vector<8x8xf32>
      %cst_69 = arith.constant dense<0x7F800000> : vector<8xf32>
      %205 = vector.multi_reduction <minimumf>, %204, %cst_69 [1] : vector<8x8xf32> to vector<8xf32>
      %206 = vector.shape_cast %205 : vector<8xf32> to vector<8x1xf32>
      %cst_70 = arith.constant 1.000000e+30 : f32
      %207 = vector.broadcast %cst_70 : f32 to vector<8x1xf32>
      %208 = arith.cmpf olt, %206, %207 : vector<8x1xf32>
      %209 = arith.select %208, %206, %77 : vector<8x1xi1>, vector<8x1xf32>
      %cst_71 = arith.constant 1.000000e+00 : f32
      %210 = vector.broadcast %cst_71 : f32 to vector<8x1xf32>
      %211 = arith.addf %210, %199 : vector<8x1xf32>
      %212 = arith.subf %211, %209 : vector<8x1xf32>
      %cst_72 = arith.constant 0.000000e+00 : f32
      %213 = vector.broadcast %cst_72 : f32 to vector<8x1xf32>
      %214 = arith.maximumf %212, %213 : vector<8x1xf32>
      %215 = arith.mulf %200, %214 : vector<8x1xf32>
      %216 = arith.addf %193, %215 : vector<8x1xf32>
      %c4_i32_73 = arith.constant 4 : i32
      %217 = vector.broadcast %c4_i32_73 : i32 to vector<8x1xi32>
      %218 = arith.cmpi eq, %79, %217 : vector<8x1xi32>
      %219 = arith.extui %218 : vector<8x1xi1> to vector<8x1xi32>
      %220 = arith.sitofp %219 : vector<8x1xi32> to vector<8x1xf32>
      %cst_74 = arith.constant dense<0.000000e+00> : vector<16x1xf32>
      %221 = tpu.matmul %80, %220, %cst_74 {dimension_numbers = #tpu.dot_dimension_numbers<[1], [0], [0], [1], [0, 0, 1, 1], [], []>} : vector<16x8xf32>, vector<8x1xf32>, vector<16x1xf32> -> vector<16x1xf32>
      %222 = vector.extract_strided_slice %221 {offsets = [0, 0], sizes = [8, 1], strides = [1, 1]} : vector<16x1xf32> to vector<8x1xf32>
      %223 = vector.extract_strided_slice %221 {offsets = [8, 0], sizes = [8, 1], strides = [1, 1]} : vector<16x1xf32> to vector<8x1xf32>
      %224 = vector.broadcast %222 : vector<8x1xf32> to vector<8x8xf32>
      %225 = arith.cmpf ogt, %25, %224 : vector<8x8xf32>
      %cst_75 = arith.constant 1.000000e+30 : f32
      %226 = vector.broadcast %cst_75 : f32 to vector<8x8xf32>
      %227 = arith.select %225, %33, %226 : vector<8x8xi1>, vector<8x8xf32>
      %cst_76 = arith.constant dense<0x7F800000> : vector<8xf32>
      %228 = vector.multi_reduction <minimumf>, %227, %cst_76 [1] : vector<8x8xf32> to vector<8xf32>
      %229 = vector.shape_cast %228 : vector<8xf32> to vector<8x1xf32>
      %cst_77 = arith.constant 1.000000e+30 : f32
      %230 = vector.broadcast %cst_77 : f32 to vector<8x1xf32>
      %231 = arith.cmpf olt, %229, %230 : vector<8x1xf32>
      %232 = arith.select %231, %229, %77 : vector<8x1xi1>, vector<8x1xf32>
      %cst_78 = arith.constant 1.000000e+00 : f32
      %233 = vector.broadcast %cst_78 : f32 to vector<8x1xf32>
      %234 = arith.addf %233, %222 : vector<8x1xf32>
      %235 = arith.subf %234, %232 : vector<8x1xf32>
      %cst_79 = arith.constant 0.000000e+00 : f32
      %236 = vector.broadcast %cst_79 : f32 to vector<8x1xf32>
      %237 = arith.maximumf %235, %236 : vector<8x1xf32>
      %238 = arith.mulf %223, %237 : vector<8x1xf32>
      %239 = arith.addf %216, %238 : vector<8x1xf32>
      %c5_i32 = arith.constant 5 : i32
      %240 = vector.broadcast %c5_i32 : i32 to vector<8x1xi32>
      %241 = arith.cmpi eq, %79, %240 : vector<8x1xi32>
      %242 = arith.extui %241 : vector<8x1xi1> to vector<8x1xi32>
      %243 = arith.sitofp %242 : vector<8x1xi32> to vector<8x1xf32>
      %cst_80 = arith.constant dense<0.000000e+00> : vector<16x1xf32>
      %244 = tpu.matmul %80, %243, %cst_80 {dimension_numbers = #tpu.dot_dimension_numbers<[1], [0], [0], [1], [0, 0, 1, 1], [], []>} : vector<16x8xf32>, vector<8x1xf32>, vector<16x1xf32> -> vector<16x1xf32>
      %245 = vector.extract_strided_slice %244 {offsets = [0, 0], sizes = [8, 1], strides = [1, 1]} : vector<16x1xf32> to vector<8x1xf32>
      %246 = vector.extract_strided_slice %244 {offsets = [8, 0], sizes = [8, 1], strides = [1, 1]} : vector<16x1xf32> to vector<8x1xf32>
      %247 = vector.broadcast %245 : vector<8x1xf32> to vector<8x8xf32>
      %248 = arith.cmpf ogt, %25, %247 : vector<8x8xf32>
      %cst_81 = arith.constant 1.000000e+30 : f32
      %249 = vector.broadcast %cst_81 : f32 to vector<8x8xf32>
      %250 = arith.select %248, %33, %249 : vector<8x8xi1>, vector<8x8xf32>
      %cst_82 = arith.constant dense<0x7F800000> : vector<8xf32>
      %251 = vector.multi_reduction <minimumf>, %250, %cst_82 [1] : vector<8x8xf32> to vector<8xf32>
      %252 = vector.shape_cast %251 : vector<8xf32> to vector<8x1xf32>
      %cst_83 = arith.constant 1.000000e+30 : f32
      %253 = vector.broadcast %cst_83 : f32 to vector<8x1xf32>
      %254 = arith.cmpf olt, %252, %253 : vector<8x1xf32>
      %255 = arith.select %254, %252, %77 : vector<8x1xi1>, vector<8x1xf32>
      %cst_84 = arith.constant 1.000000e+00 : f32
      %256 = vector.broadcast %cst_84 : f32 to vector<8x1xf32>
      %257 = arith.addf %256, %245 : vector<8x1xf32>
      %258 = arith.subf %257, %255 : vector<8x1xf32>
      %cst_85 = arith.constant 0.000000e+00 : f32
      %259 = vector.broadcast %cst_85 : f32 to vector<8x1xf32>
      %260 = arith.maximumf %258, %259 : vector<8x1xf32>
      %261 = arith.mulf %246, %260 : vector<8x1xf32>
      %262 = arith.addf %239, %261 : vector<8x1xf32>
      %c6_i32 = arith.constant 6 : i32
      %263 = vector.broadcast %c6_i32 : i32 to vector<8x1xi32>
      %264 = arith.cmpi eq, %79, %263 : vector<8x1xi32>
      %265 = arith.extui %264 : vector<8x1xi1> to vector<8x1xi32>
      %266 = arith.sitofp %265 : vector<8x1xi32> to vector<8x1xf32>
      %cst_86 = arith.constant dense<0.000000e+00> : vector<16x1xf32>
      %267 = tpu.matmul %80, %266, %cst_86 {dimension_numbers = #tpu.dot_dimension_numbers<[1], [0], [0], [1], [0, 0, 1, 1], [], []>} : vector<16x8xf32>, vector<8x1xf32>, vector<16x1xf32> -> vector<16x1xf32>
      %268 = vector.extract_strided_slice %267 {offsets = [0, 0], sizes = [8, 1], strides = [1, 1]} : vector<16x1xf32> to vector<8x1xf32>
      %269 = vector.extract_strided_slice %267 {offsets = [8, 0], sizes = [8, 1], strides = [1, 1]} : vector<16x1xf32> to vector<8x1xf32>
      %270 = vector.broadcast %268 : vector<8x1xf32> to vector<8x8xf32>
      %271 = arith.cmpf ogt, %25, %270 : vector<8x8xf32>
      %cst_87 = arith.constant 1.000000e+30 : f32
      %272 = vector.broadcast %cst_87 : f32 to vector<8x8xf32>
      %273 = arith.select %271, %33, %272 : vector<8x8xi1>, vector<8x8xf32>
      %cst_88 = arith.constant dense<0x7F800000> : vector<8xf32>
      %274 = vector.multi_reduction <minimumf>, %273, %cst_88 [1] : vector<8x8xf32> to vector<8xf32>
      %275 = vector.shape_cast %274 : vector<8xf32> to vector<8x1xf32>
      %cst_89 = arith.constant 1.000000e+30 : f32
      %276 = vector.broadcast %cst_89 : f32 to vector<8x1xf32>
      %277 = arith.cmpf olt, %275, %276 : vector<8x1xf32>
      %278 = arith.select %277, %275, %77 : vector<8x1xi1>, vector<8x1xf32>
      %cst_90 = arith.constant 1.000000e+00 : f32
      %279 = vector.broadcast %cst_90 : f32 to vector<8x1xf32>
      %280 = arith.addf %279, %268 : vector<8x1xf32>
      %281 = arith.subf %280, %278 : vector<8x1xf32>
      %cst_91 = arith.constant 0.000000e+00 : f32
      %282 = vector.broadcast %cst_91 : f32 to vector<8x1xf32>
      %283 = arith.maximumf %281, %282 : vector<8x1xf32>
      %284 = arith.mulf %269, %283 : vector<8x1xf32>
      %285 = arith.addf %262, %284 : vector<8x1xf32>
      %c7_i32 = arith.constant 7 : i32
      %286 = vector.broadcast %c7_i32 : i32 to vector<8x1xi32>
      %287 = arith.cmpi eq, %79, %286 : vector<8x1xi32>
      %288 = arith.extui %287 : vector<8x1xi1> to vector<8x1xi32>
      %289 = arith.sitofp %288 : vector<8x1xi32> to vector<8x1xf32>
      %cst_92 = arith.constant dense<0.000000e+00> : vector<16x1xf32>
      %290 = tpu.matmul %80, %289, %cst_92 {dimension_numbers = #tpu.dot_dimension_numbers<[1], [0], [0], [1], [0, 0, 1, 1], [], []>} : vector<16x8xf32>, vector<8x1xf32>, vector<16x1xf32> -> vector<16x1xf32>
      %291 = vector.extract_strided_slice %290 {offsets = [0, 0], sizes = [8, 1], strides = [1, 1]} : vector<16x1xf32> to vector<8x1xf32>
      %292 = vector.extract_strided_slice %290 {offsets = [8, 0], sizes = [8, 1], strides = [1, 1]} : vector<16x1xf32> to vector<8x1xf32>
      %293 = vector.broadcast %291 : vector<8x1xf32> to vector<8x8xf32>
      %294 = arith.cmpf ogt, %25, %293 : vector<8x8xf32>
      %cst_93 = arith.constant 1.000000e+30 : f32
      %295 = vector.broadcast %cst_93 : f32 to vector<8x8xf32>
      %296 = arith.select %294, %33, %295 : vector<8x8xi1>, vector<8x8xf32>
      %cst_94 = arith.constant dense<0x7F800000> : vector<8xf32>
      %297 = vector.multi_reduction <minimumf>, %296, %cst_94 [1] : vector<8x8xf32> to vector<8xf32>
      %298 = vector.shape_cast %297 : vector<8xf32> to vector<8x1xf32>
      %cst_95 = arith.constant 1.000000e+30 : f32
      %299 = vector.broadcast %cst_95 : f32 to vector<8x1xf32>
      %300 = arith.cmpf olt, %298, %299 : vector<8x1xf32>
      %301 = arith.select %300, %298, %77 : vector<8x1xi1>, vector<8x1xf32>
      %cst_96 = arith.constant 1.000000e+00 : f32
      %302 = vector.broadcast %cst_96 : f32 to vector<8x1xf32>
      %303 = arith.addf %302, %291 : vector<8x1xf32>
      %304 = arith.subf %303, %301 : vector<8x1xf32>
      %cst_97 = arith.constant 0.000000e+00 : f32
      %305 = vector.broadcast %cst_97 : f32 to vector<8x1xf32>
      %306 = arith.maximumf %304, %305 : vector<8x1xf32>
      %307 = arith.mulf %292, %306 : vector<8x1xf32>
      %308 = arith.addf %285, %307 : vector<8x1xf32>
      %c8_i32_98 = arith.constant 8 : i32
      %c0_99 = arith.constant 0 : index
      %309 = memref.load %arg8[%c0_99] : memref<1xf32, #tpu.memory_space<smem>>
      %310 = vector.shape_cast %308 : vector<8x1xf32> to vector<1x8x1xf32>
      %cst_100 = arith.constant dense<0.000000e+00> : vector<1xf32>
      %311 = vector.multi_reduction <add>, %310, %cst_100 [1, 2] : vector<1x8x1xf32> to vector<1xf32>
      %312 = vector.shape_cast %311 : vector<1xf32> to vector<1x1x1xf32>
      %313 = vector.extract %312[0, 0, 0] : f32 from vector<1x1x1xf32>
      %314 = arith.addf %309, %313 : f32
      %c0_101 = arith.constant 0 : index
      %315 = memref.load %arg8[%c0_101] : memref<1xf32, #tpu.memory_space<smem>>
      memref.store %314, %arg8[%c0_101] : memref<1xf32, #tpu.memory_space<smem>>
    } else {
    }
    %88 = tpu.iota {dimensions = array<i32: 0>} : vector<8x128xi32>
    %89 = tpu.iota {dimensions = array<i32: 1>} : vector<8x128xi32>
    %c128_i32 = arith.constant 128 : i32
    %90 = vector.broadcast %c128_i32 : i32 to vector<8x128xi32>
    %91 = arith.muli %88, %90 : vector<8x128xi32>
    %92 = arith.addi %91, %89 : vector<8x128xi32>
    %c0_i32_35 = arith.constant 0 : i32
    %93 = vector.broadcast %c0_i32_35 : i32 to vector<8x128xi32>
    %94 = arith.cmpi eq, %92, %93 : vector<8x128xi32>
    %c0_36 = arith.constant 0 : index
    %95 = memref.load %arg8[%c0_36] : memref<1xf32, #tpu.memory_space<smem>>
    %cst_37 = arith.constant 0.000000e+00 : f32
    %96 = vector.broadcast %95 : f32 to vector<8x128xf32>
    %97 = vector.broadcast %cst_37 : f32 to vector<8x128xf32>
    %98 = arith.select %94, %96, %97 : vector<8x128xi1>, vector<8x128xf32>
    %c1_i32 = arith.constant 1 : i32
    %99 = vector.broadcast %c1_i32 : i32 to vector<8x128xi32>
    %100 = arith.cmpi eq, %92, %99 : vector<8x128xi32>
    %cst_38 = arith.constant 0.000000e+00 : f32
    %101 = vector.broadcast %66 : f32 to vector<8x128xf32>
    %102 = vector.broadcast %cst_38 : f32 to vector<8x128xf32>
    %103 = arith.select %100, %101, %102 : vector<8x128xi1>, vector<8x128xf32>
    %104 = arith.addf %98, %103 : vector<8x128xf32>
    %c2_i32 = arith.constant 2 : i32
    %105 = vector.broadcast %c2_i32 : i32 to vector<8x128xi32>
    %106 = arith.cmpi eq, %92, %105 : vector<8x128xi32>
    %cst_39 = arith.constant 0.000000e+00 : f32
    %107 = vector.broadcast %49 : f32 to vector<8x128xf32>
    %108 = vector.broadcast %cst_39 : f32 to vector<8x128xf32>
    %109 = arith.select %106, %107, %108 : vector<8x128xi1>, vector<8x128xf32>
    %110 = arith.addf %104, %109 : vector<8x128xf32>
    %c3_i32 = arith.constant 3 : i32
    %111 = vector.broadcast %c3_i32 : i32 to vector<8x128xi32>
    %112 = arith.cmpi eq, %92, %111 : vector<8x128xi32>
    %cst_40 = arith.constant 0.000000e+00 : f32
    %113 = vector.broadcast %54 : f32 to vector<8x128xf32>
    %114 = vector.broadcast %cst_40 : f32 to vector<8x128xf32>
    %115 = arith.select %112, %113, %114 : vector<8x128xi1>, vector<8x128xf32>
    %116 = arith.addf %110, %115 : vector<8x128xf32>
    %c4_i32 = arith.constant 4 : i32
    %117 = vector.broadcast %c4_i32 : i32 to vector<8x128xi32>
    %118 = arith.cmpi eq, %92, %117 : vector<8x128xi32>
    %cst_41 = arith.constant 0.000000e+00 : f32
    %119 = vector.broadcast %62 : f32 to vector<8x128xf32>
    %120 = vector.broadcast %cst_41 : f32 to vector<8x128xf32>
    %121 = arith.select %118, %119, %120 : vector<8x128xi1>, vector<8x128xf32>
    %122 = arith.addf %116, %121 : vector<8x128xf32>
    %c0_42 = arith.constant 0 : index
    %c0_43 = arith.constant 0 : index
    %123 = vector.load %arg7[%c0_42, %c0_43] : memref<8x128xf32, #tpu.memory_space<vmem>>, vector<8x128xf32>
    tpu.vector_store %arg7[%c0_42, %c0_43], %122 {strides = array<i32>} : memref<8x128xf32, #tpu.memory_space<vmem>>, vector<8x128xf32>,
    return
  }
  func.func @transform_0(%arg0: i32) -> (i32, i32) {
    %c0_i32 = arith.constant 0 : i32
    %c0_i32_0 = arith.constant 0 : i32
    return %arg0, %c0_i32 : i32, i32
  }
  func.func @transform_1(%arg0: i32) -> (i32, i32) {
    %c0_i32 = arith.constant 0 : i32
    %c0_i32_0 = arith.constant 0 : i32
    %c0_i32_1 = arith.constant 0 : i32
    return %c0_i32, %c0_i32_0 : i32, i32
  }
  func.func @transform_2(%arg0: i32) -> (i32, i32) {
    %c0_i32 = arith.constant 0 : i32
    %c0_i32_0 = arith.constant 0 : i32
    return %arg0, %c0_i32 : i32, i32
  }
  func.func @transform_3(%arg0: i32) -> (i32, i32) {
    %c0_i32 = arith.constant 0 : i32
    %c0_i32_0 = arith.constant 0 : i32
    %c0_i32_1 = arith.constant 0 : i32
    return %c0_i32, %c0_i32_0 : i32, i32
  }
  func.func @transform_4(%arg0: i32) -> (i32, i32) {
    %c0_i32 = arith.constant 0 : i32
    %c0_i32_0 = arith.constant 0 : i32
    return %arg0, %c0_i32 : i32, i32
  }
  func.func @transform_5(%arg0: i32) -> (i32, i32) {
    %c0_i32 = arith.constant 0 : i32
    %c0_i32_0 = arith.constant 0 : i32
    %c0_i32_1 = arith.constant 0 : i32
    return %c0_i32, %c0_i32_0 : i32, i32
  }
  func.func @transform_6(%arg0: i32) -> (i32, i32) {
    %c0_i32 = arith.constant 0 : i32
    %c0_i32_0 = arith.constant 0 : i32
    return %arg0, %c0_i32 : i32, i32
  }
}

</mosaic_0001>

<llo_original>
// kernel: tpu_custom_call.1
$region0: #{tpu_custom_call.1}
  #allocation0 [shape = 'u32[]', space=smem, size = 0x4, offset = 0x4, fixed_abs, tag = 'smem constant byte address 0x4 - core index']
  #allocation1 [shape = 'u32[72,128]{1,0:T(1,128)}', space=vmem, size = 0x9000, scoped, tag = 'internal scratch']
  #allocation2 [shape = 'f32[1]{0:T(128)}', space=smem, size = 0x200, scoped, tag = 'scratch operand']
  %s0 = inlined_call_operand.vmem [shape: s32[8,1], index: 0, kind: input, shape index: {}]
  %s1 = inlined_call_operand.vmem [shape: s32[1,8], index: 1, kind: input, shape index: {}]
  %s2 = inlined_call_operand.vmem [shape: f32[8,1], index: 2, kind: input, shape index: {}]
  %s3 = inlined_call_operand.vmem [shape: f32[1,8], index: 3, kind: input, shape index: {}]
  %s4 = inlined_call_operand.vmem [shape: f32[8,32], index: 4, kind: input, shape index: {}]
  %s5 = inlined_call_operand.vmem [shape: f32[32,8], index: 5, kind: input, shape index: {}]
  %s6 = inlined_call_operand.hbm [shape: f32[8,128], index: 6, kind: output, shape index: {}]
  %s7 = sld [smem:[#allocation0]]
  $region38: #{tpu_custom_call.1} parent=0
    _
  %s9 = ssub.s32 1, %s7
  %s10 = scalar_select 0, %s9, %s7
  $region1: #{tpu_custom_call.1} parent=0
    #allocation3 [shape = 'u8[4096]{0}', space=vmem, size = 0x1000, scoped, tag = 'output window, operand 0, single buffered']
    #allocation4 [shape = 's32[1]{0}', space=sflag, size = 0x4, scoped, tag = 'scoped memory for tpu_custom_call.1']
    %11 = vsyncpa [#allocation4], 0
    // Predicated region
    $region2: #{tpu_custom_call.1} parent=1 // pred_check
      _
    $region3: #{tpu_custom_call.1} parent=1 // pred_check_branch
      %13 = sbr.rel (0) target = $region5
    $region4: #{tpu_custom_call.1} parent=1 // pred_region
      _
    $region5: #{tpu_custom_call.1} parent=1 // pred_fallthru
      _
    // Predicated region
    $region6: #{tpu_custom_call.1} parent=1 // pred_check
      _
    $region7: #{tpu_custom_call.1} parent=1 // pred_check_branch
      %15 = sbr.rel (0) target = $region9
    $region8: #{tpu_custom_call.1} parent=1 // pred_region
      _
    $region9: #{tpu_custom_call.1} parent=1 // pred_fallthru
      _
    // Predicated region
    $region10: #{tpu_custom_call.1} parent=1 // pred_check
      _
    $region11: #{tpu_custom_call.1} parent=1 // pred_check_branch
      %17 = sbr.rel (0) target = $region13
    $region12: #{tpu_custom_call.1} parent=1 // pred_region
      _
    $region13: #{tpu_custom_call.1} parent=1 // pred_fallthru
      _
    // Predicated region
    $region14: #{tpu_custom_call.1} parent=1 // pred_check
      _
    $region15: #{tpu_custom_call.1} parent=1 // pred_check_branch
      %19 = sbr.rel (0) target = $region17
    $region16: #{tpu_custom_call.1} parent=1 // pred_region
      _
    $region17: #{tpu_custom_call.1} parent=1 // pred_fallthru
      _
    // Predicated region
    $region18: #{tpu_custom_call.1} parent=1 // pred_check
      _
    $region19: #{tpu_custom_call.1} parent=1 // pred_check_branch
      %21 = sbr.rel (0) target = $region21
    $region20: #{tpu_custom_call.1} parent=1 // pred_region
      _
    $region21: #{tpu_custom_call.1} parent=1 // pred_fallthru
      _
    // Predicated region
    $region22: #{tpu_custom_call.1} parent=1 // pred_check
      _
    $region23: #{tpu_custom_call.1} parent=1 // pred_check_branch
      %23 = sbr.rel (0) target = $region25
    $region24: #{tpu_custom_call.1} parent=1 // pred_region
      _
    $region25: #{tpu_custom_call.1} parent=1 // pred_fallthru
      _
    %v24 = vld [vmem:[%s4] sm:$0xff]
    %v25 = vld [vmem:[%s5] sm:$0xff]
    %v26 = vld [vmem:[%s5 + $0x8] sm:$0xff]
    %v27 = vld [vmem:[%s5 + $0x10] sm:$0xff]
    %v28 = vld [vmem:[%s5 + $0x18] sm:$0xff]
    %s29 = smul.u32 0, 8
    %vm30 = vcmask 261120
    %v32 = vsel %vm30, %v24, 0
    %34 = vmatpush.msra.mxu0 0.0
    %35 = vmatpush.msra.mxu0 0.0
    %36 = vmatpush.msra.mxu0 0.0
    %37 = vmatpush.msra.mxu0 0.0
    %38 = vmatpush.msra.mxu0 0.0
    %39 = vmatpush.msra.mxu0 0.0
    %40 = vmatpush.msra.mxu0 0.0
    %41 = vmatpush.msra.mxu0 0.0
    %42 = vmatpush.msra.mxu0 0.0
    %43 = vmatpush.msra.mxu0 0.0
    %44 = vmatpush.msra.mxu0 0.0
    %45 = vmatpush.msra.mxu0 0.0
    %46 = vmatpush.msra.mxu0 %v28
    %47 = vmatpush.msra.mxu0 %v27
    %48 = vmatpush.msra.mxu0 %v26
    %49 = vmatpush.msra.mxu0 %v25
    %50 = vmatmul.f32.gmra.mxu0 %v32
    %v51 = vpop.f32.mrf.mxu0
    %v52 = vadd.f32 0.0, %v51
    %53 = vdwg.mxu0
    %v54 = vld [vmem:[%s2] sm:$0xff]
    %v55 = vld [vmem:[%s3] sm:$0x1]
    %v56 = vlaneseq
    %v57 = vshrl.u32 %v56, 7
    %v58 = vstv %s29
    %v59 = vadd.s32 %v58, %v57
    %v60 = vlaneseq
    %v61 = vand.u32 %v60, 127
    %vm62 = vcmp.eq.s32.totalorder %v59, %v61
    %vm63 = vcmp.ge.s32.totalorder %v61, 8
    %vm64 = vcmp.lt.s32.totalorder %v59, 8
    %66 = vset.pattern.permute.xlu0 0
    %67 = vperm.xlu0 %66, %v54
    %v68 = vpop.permute.xlu0 %67
    %v71 = vperm.slane %v55, 0
    %v73 = vadd.f32 %v68, %v71
    %v74 = vmul.f32 %v52, 2.0
    %v75 = vsub.f32 %v73, %v74
    %v76 = vmax.f32 %v75, 0.0
    %v77 = vsel %vm62, 0.0, %v76
    %v78 = vld [vmem:[%s0] sm:$0xff]
    %v79 = vld [vmem:[%s1] sm:$0x1]
    %80 = vset.pattern.permute.xlu0 0
    %81 = vperm.xlu0 %80, %v78
    %v82 = vpop.permute.xlu0 %81
    %v83 = vperm.slane %v79, 0
    %vm84 = vcmp.eq.s32.totalorder %v82, %v83
    %vm85 = vmor %vm84, %vm63
    %v86 = vsel %vm85, 1e+30, %v77
    %vm87 = vmor %vm62, %vm63
    %vm88 = vmxor %vm84, 1
    %vm89 = vmor %vm87, %vm88
    %v90 = vsel %vm89, 0.0, 1.0
    %v91 = vsel %vm64, 1, 0
    %vm92 = vcmp.eq.s32.totalorder %v91, 1
    %v93 = vsel %vm92, %v90, 0.0
    %v94 = vsel %vm84, 0.0, %v52
    %vm95 = vcmask 64512
    %v96 = vsel %vm95, %v94, 0.0
    %97 = vadd.xlane.f32.xlu0 %v96
    %v98 = vpop.xlane.xlu0 %97
    %v99 = vrot.slane %v98, 4
    %v100 = vadd.f32 %v98, %v99
    %v101 = vrot.slane %v100, 2
    %v102 = vadd.f32 %v100, %v101
    %v103 = vrot.slane %v102, 1
    %v104 = vadd.f32 %v102, %v103
    %s105 = vtos %v104
    %v106 = vmul.f32 %v94, %v94
    %v107 = vsel %vm95, %v106, 0.0
    %108 = vadd.xlane.f32.xlu0 %v107
    %v109 = vpop.xlane.xlu0 %108
    %v110 = vrot.slane %v109, 4
    %v111 = vadd.f32 %v109, %v110
    %v112 = vrot.slane %v111, 2
    %v113 = vadd.f32 %v111, %v112
    %v114 = vrot.slane %v113, 1
    %v115 = vadd.f32 %v113, %v114
    %s116 = vtos %v115
    %vm117 = vcmp.gt.f32.partialorder %v94, 1e-16
    %v118 = vsel %vm117, 1, 0
    %v119 = vcvt.s32.f32 %v118
    %v120 = vsel %vm95, %v119, 0.0
    %121 = vadd.xlane.f32.xlu0 %v120
    %v122 = vpop.xlane.xlu0 %121
    %v123 = vrot.slane %v122, 4
    %v124 = vadd.f32 %v122, %v123
    %v125 = vrot.slane %v124, 2
    %v126 = vadd.f32 %v124, %v125
    %v127 = vrot.slane %v126, 1
    %v128 = vadd.f32 %v126, %v127
    %s129 = vtos %v128
    %v130 = vsel %vm95, %v93, 0.0
    %131 = vadd.xlane.f32.xlu0 %v130
    %v132 = vpop.xlane.xlu0 %131
    %v133 = vrot.slane %v132, 4
    %v134 = vadd.f32 %v132, %v133
    %v135 = vrot.slane %v134, 2
    %v136 = vadd.f32 %v134, %v135
    %v137 = vrot.slane %v136, 1
    %v138 = vadd.f32 %v136, %v137
    %s139 = vtos %v138
    %v140 = vsel %vm95, %v77, inf
    %141 = vmin.xlane.f32.xlu0 %v140
    %v142 = vpop.xlane.xlu0 %141
    %v143 = vsel %vm85, 0.0, 1.0
    %v144 = vsub.f32 %v77, %v142
    %v145 = vmul.f32 %v144, %v143
    %v146 = vsel %vm95, %v145, -inf
    %147 = vmax.xlane.f32.xlu0 %v146
    %v148 = vpop.xlane.xlu0 %147
    %v149 = vadd.f32 %v148, %v142
    %s150 = scalar_lea.smem [#allocation2], 0
    %151 = sst [smem:[%s150]] 0.0
    %p152 = scmp.gt.f32.partialorder %s139, 0.0
    // Predicated region
    $region26: #{tpu_custom_call.1} parent=1 // pred_check
      %p153 = pneg %p152
    $region27: #{tpu_custom_call.1} parent=1 // pred_check_branch
      %155 = sbr.rel (%p153) target = $region29
    $region28: #{tpu_custom_call.1} parent=1 // pred_region
      %vm156 = vcmp.eq.s32.totalorder %v57, 0
      %v157 = vsel %vm156, 1, 0
      %v158 = vcvt.s32.f32 %v157
      %v160 = vsel %vm95, %v77, 0
      %v163 = vsel %vm95, %v93, 0
      %165 = vmatpush.msra.mxu0 0.0
      %166 = vmatpush.msra.mxu0 0.0
      %167 = vmatpush.msra.mxu0 0.0
      %168 = vmatpush.msra.mxu0 0.0
      %169 = vmatpush.msra.mxu0 0.0
      %170 = vmatpush.msra.mxu0 0.0
      %171 = vmatpush.msra.mxu0 0.0
      %172 = vmatpush.msra.mxu0 0.0
      %173 = vmatpush.msra.mxu0 0.0
      %174 = vmatpush.msra.mxu0 0.0
      %175 = vmatpush.msra.mxu0 0.0
      %176 = vmatpush.msra.mxu0 0.0
      %177 = vmatpush.msra.mxu0 0.0
      %178 = vmatpush.msra.mxu0 0.0
      %179 = vmatpush.msra.mxu0 0.0
      %180 = vmatpush.msra.mxu0 %v158
      %181 = vmatmul.f32.gmra.mxu0 %v160
      %v182 = vpop.f32.mrf.mxu0
      %v183 = vadd.f32 0.0, %v182
      %184 = vmatmul.f32.gmra.mxu0 %v163
      %v185 = vpop.f32.mrf.mxu0
      %v186 = vadd.f32 0.0, %v185
      %187 = vdwg.mxu0
      %189 = vset.pattern.permute.xlu0 0
      %190 = vperm.xlu0 %189, %v183
      %v191 = vpop.permute.xlu0 %190
      %vm193 = vcmp.gt.f32.partialorder %v77, %v191
      %v194 = vsel %vm193, %v86, 1e+30
      %v195 = vsel %vm95, %v194, inf
      %196 = vmin.xlane.f32.xlu0 %v195
      %v197 = vpop.xlane.xlu0 %196
      %vm198 = vcmp.lt.f32.partialorder %v197, 1e+30
      %v199 = vsel %vm198, %v197, %v149
      %v200 = vadd.f32 %v183, 1.0
      %v201 = vsub.f32 %v200, %v199
      %v202 = vmax.f32 %v201, 0.0
      %v203 = vmul.f32 %v186, %v202
      %v204 = vadd.f32 %v203, 0.0
      %vm205 = vcmp.eq.s32.totalorder %v57, 1
      %v206 = vsel %vm205, 1, 0
      %v207 = vcvt.s32.f32 %v206
      %208 = vmatpush.msra.mxu0 0.0
      %209 = vmatpush.msra.mxu0 0.0
      %210 = vmatpush.msra.mxu0 0.0
      %211 = vmatpush.msra.mxu0 0.0
      %212 = vmatpush.msra.mxu0 0.0
      %213 = vmatpush.msra.mxu0 0.0
      %214 = vmatpush.msra.mxu0 0.0
      %215 = vmatpush.msra.mxu0 0.0
      %216 = vmatpush.msra.mxu0 0.0
      %217 = vmatpush.msra.mxu0 0.0
      %218 = vmatpush.msra.mxu0 0.0
      %219 = vmatpush.msra.mxu0 0.0
      %220 = vmatpush.msra.mxu0 0.0
      %221 = vmatpush.msra.mxu0 0.0
      %222 = vmatpush.msra.mxu0 0.0
      %223 = vmatpush.msra.mxu0 %v207
      %224 = vmatmul.f32.gmra.mxu0 %v160
      %v225 = vpop.f32.mrf.mxu0
      %v226 = vadd.f32 0.0, %v225
      %227 = vmatmul.f32.gmra.mxu0 %v163
      %v228 = vpop.f32.mrf.mxu0
      %v229 = vadd.f32 0.0, %v228
      %230 = vdwg.mxu0
      %232 = vset.pattern.permute.xlu0 0
      %233 = vperm.xlu0 %232, %v226
      %v234 = vpop.permute.xlu0 %233
      %vm236 = vcmp.gt.f32.partialorder %v77, %v234
      %v237 = vsel %vm236, %v86, 1e+30
      %v238 = vsel %vm95, %v237, inf
      %239 = vmin.xlane.f32.xlu0 %v238
      %v240 = vpop.xlane.xlu0 %239
      %vm241 = vcmp.lt.f32.partialorder %v240, 1e+30
      %v242 = vsel %vm241, %v240, %v149
      %v243 = vadd.f32 %v226, 1.0
      %v244 = vsub.f32 %v243, %v242
      %v245 = vmax.f32 %v244, 0.0
      %v246 = vmul.f32 %v229, %v245
      %v247 = vadd.f32 %v204, %v246
      %vm248 = vcmp.eq.s32.totalorder %v57, 2
      %v249 = vsel %vm248, 1, 0
      %v250 = vcvt.s32.f32 %v249
      %251 = vmatpush.msra.mxu0 0.0
      %252 = vmatpush.msra.mxu0 0.0
      %253 = vmatpush.msra.mxu0 0.0
      %254 = vmatpush.msra.mxu0 0.0
      %255 = vmatpush.msra.mxu0 0.0
      %256 = vmatpush.msra.mxu0 0.0
      %257 = vmatpush.msra.mxu0 0.0
      %258 = vmatpush.msra.mxu0 0.0
      %259 = vmatpush.msra.mxu0 0.0
      %260 = vmatpush.msra.mxu0 0.0
      %261 = vmatpush.msra.mxu0 0.0
      %262 = vmatpush.msra.mxu0 0.0
      %263 = vmatpush.msra.mxu0 0.0
      %264 = vmatpush.msra.mxu0 0.0
      %265 = vmatpush.msra.mxu0 0.0
      %266 = vmatpush.msra.mxu0 %v250
      %267 = vmatmul.f32.gmra.mxu0 %v160
      %v268 = vpop.f32.mrf.mxu0
      %v269 = vadd.f32 0.0, %v268
      %270 = vmatmul.f32.gmra.mxu0 %v163
      %v271 = vpop.f32.mrf.mxu0
      %v272 = vadd.f32 0.0, %v271
      %273 = vdwg.mxu0
      %275 = vset.pattern.permute.xlu0 0
      %276 = vperm.xlu0 %275, %v269
      %v277 = vpop.permute.xlu0 %276
      %vm279 = vcmp.gt.f32.partialorder %v77, %v277
      %v280 = vsel %vm279, %v86, 1e+30
      %v281 = vsel %vm95, %v280, inf
      %282 = vmin.xlane.f32.xlu0 %v281
      %v283 = vpop.xlane.xlu0 %282
      %vm284 = vcmp.lt.f32.partialorder %v283, 1e+30
      %v285 = vsel %vm284, %v283, %v149
      %v286 = vadd.f32 %v269, 1.0
      %v287 = vsub.f32 %v286, %v285
      %v288 = vmax.f32 %v287, 0.0
      %v289 = vmul.f32 %v272, %v288
      %v290 = vadd.f32 %v247, %v289
      %vm291 = vcmp.eq.s32.totalorder %v57, 3
      %v292 = vsel %vm291, 1, 0
      %v293 = vcvt.s32.f32 %v292
      %294 = vmatpush.msra.mxu0 0.0
      %295 = vmatpush.msra.mxu0 0.0
      %296 = vmatpush.msra.mxu0 0.0
      %297 = vmatpush.msra.mxu0 0.0
      %298 = vmatpush.msra.mxu0 0.0
      %299 = vmatpush.msra.mxu0 0.0
      %300 = vmatpush.msra.mxu0 0.0
      %301 = vmatpush.msra.mxu0 0.0
      %302 = vmatpush.msra.mxu0 0.0
      %303 = vmatpush.msra.mxu0 0.0
      %304 = vmatpush.msra.mxu0 0.0
      %305 = vmatpush.msra.mxu0 0.0
      %306 = vmatpush.msra.mxu0 0.0
      %307 = vmatpush.msra.mxu0 0.0
      %308 = vmatpush.msra.mxu0 0.0
      %309 = vmatpush.msra.mxu0 %v293
      %310 = vmatmul.f32.gmra.mxu0 %v160
      %v311 = vpop.f32.mrf.mxu0
      %v312 = vadd.f32 0.0, %v311
      %313 = vmatmul.f32.gmra.mxu0 %v163
      %v314 = vpop.f32.mrf.mxu0
      %v315 = vadd.f32 0.0, %v314
      %316 = vdwg.mxu0
      %318 = vset.pattern.permute.xlu0 0
      %319 = vperm.xlu0 %318, %v312
      %v320 = vpop.permute.xlu0 %319
      %vm322 = vcmp.gt.f32.partialorder %v77, %v320
      %v323 = vsel %vm322, %v86, 1e+30
      %v324 = vsel %vm95, %v323, inf
      %325 = vmin.xlane.f32.xlu0 %v324
      %v326 = vpop.xlane.xlu0 %325
      %vm327 = vcmp.lt.f32.partialorder %v326, 1e+30
      %v328 = vsel %vm327, %v326, %v149
      %v329 = vadd.f32 %v312, 1.0
      %v330 = vsub.f32 %v329, %v328
      %v331 = vmax.f32 %v330, 0.0
      %v332 = vmul.f32 %v315, %v331
      %v333 = vadd.f32 %v290, %v332
      %vm334 = vcmp.eq.s32.totalorder %v57, 4
      %v335 = vsel %vm334, 1, 0
      %v336 = vcvt.s32.f32 %v335
      %337 = vmatpush.msra.mxu0 0.0
      %338 = vmatpush.msra.mxu0 0.0
      %339 = vmatpush.msra.mxu0 0.0
      %340 = vmatpush.msra.mxu0 0.0
      %341 = vmatpush.msra.mxu0 0.0
      %342 = vmatpush.msra.mxu0 0.0
      %343 = vmatpush.msra.mxu0 0.0
      %344 = vmatpush.msra.mxu0 0.0
      %345 = vmatpush.msra.mxu0 0.0
      %346 = vmatpush.msra.mxu0 0.0
      %347 = vmatpush.msra.mxu0 0.0
      %348 = vmatpush.msra.mxu0 0.0
      %349 = vmatpush.msra.mxu0 0.0
      %350 = vmatpush.msra.mxu0 0.0
      %351 = vmatpush.msra.mxu0 0.0
      %352 = vmatpush.msra.mxu0 %v336
      %353 = vmatmul.f32.gmra.mxu0 %v160
      %v354 = vpop.f32.mrf.mxu0
      %v355 = vadd.f32 0.0, %v354
      %356 = vmatmul.f32.gmra.mxu0 %v163
      %v357 = vpop.f32.mrf.mxu0
      %v358 = vadd.f32 0.0, %v357
      %359 = vdwg.mxu0
      %361 = vset.pattern.permute.xlu0 0
      %362 = vperm.xlu0 %361, %v355
      %v363 = vpop.permute.xlu0 %362
      %vm365 = vcmp.gt.f32.partialorder %v77, %v363
      %v366 = vsel %vm365, %v86, 1e+30
      %v367 = vsel %vm95, %v366, inf
      %368 = vmin.xlane.f32.xlu0 %v367
      %v369 = vpop.xlane.xlu0 %368
      %vm370 = vcmp.lt.f32.partialorder %v369, 1e+30
      %v371 = vsel %vm370, %v369, %v149
      %v372 = vadd.f32 %v355, 1.0
      %v373 = vsub.f32 %v372, %v371
      %v374 = vmax.f32 %v373, 0.0
      %v375 = vmul.f32 %v358, %v374
      %v376 = vadd.f32 %v333, %v375
      %vm377 = vcmp.eq.s32.totalorder %v57, 5
      %v378 = vsel %vm377, 1, 0
      %v379 = vcvt.s32.f32 %v378
      %380 = vmatpush.msra.mxu0 0.0
      %381 = vmatpush.msra.mxu0 0.0
      %382 = vmatpush.msra.mxu0 0.0
      %383 = vmatpush.msra.mxu0 0.0
      %384 = vmatpush.msra.mxu0 0.0
      %385 = vmatpush.msra.mxu0 0.0
      %386 = vmatpush.msra.mxu0 0.0
      %387 = vmatpush.msra.mxu0 0.0
      %388 = vmatpush.msra.mxu0 0.0
      %389 = vmatpush.msra.mxu0 0.0
      %390 = vmatpush.msra.mxu0 0.0
      %391 = vmatpush.msra.mxu0 0.0
      %392 = vmatpush.msra.mxu0 0.0
      %393 = vmatpush.msra.mxu0 0.0
      %394 = vmatpush.msra.mxu0 0.0
      %395 = vmatpush.msra.mxu0 %v379
      %396 = vmatmul.f32.gmra.mxu0 %v160
      %v397 = vpop.f32.mrf.mxu0
      %v398 = vadd.f32 0.0, %v397
      %399 = vmatmul.f32.gmra.mxu0 %v163
      %v400 = vpop.f32.mrf.mxu0
      %v401 = vadd.f32 0.0, %v400
      %402 = vdwg.mxu0
      %404 = vset.pattern.permute.xlu0 0
      %405 = vperm.xlu0 %404, %v398
      %v406 = vpop.permute.xlu0 %405
      %vm408 = vcmp.gt.f32.partialorder %v77, %v406
      %v409 = vsel %vm408, %v86, 1e+30
      %v410 = vsel %vm95, %v409, inf
      %411 = vmin.xlane.f32.xlu0 %v410
      %v412 = vpop.xlane.xlu0 %411
      %vm413 = vcmp.lt.f32.partialorder %v412, 1e+30
      %v414 = vsel %vm413, %v412, %v149
      %v415 = vadd.f32 %v398, 1.0
      %v416 = vsub.f32 %v415, %v414
      %v417 = vmax.f32 %v416, 0.0
      %v418 = vmul.f32 %v401, %v417
      %v419 = vadd.f32 %v376, %v418
      %vm420 = vcmp.eq.s32.totalorder %v57, 6
      %v421 = vsel %vm420, 1, 0
      %v422 = vcvt.s32.f32 %v421
      %423 = vmatpush.msra.mxu0 0.0
      %424 = vmatpush.msra.mxu0 0.0
      %425 = vmatpush.msra.mxu0 0.0
      %426 = vmatpush.msra.mxu0 0.0
      %427 = vmatpush.msra.mxu0 0.0
      %428 = vmatpush.msra.mxu0 0.0
      %429 = vmatpush.msra.mxu0 0.0
      %430 = vmatpush.msra.mxu0 0.0
      %431 = vmatpush.msra.mxu0 0.0
      %432 = vmatpush.msra.mxu0 0.0
      %433 = vmatpush.msra.mxu0 0.0
      %434 = vmatpush.msra.mxu0 0.0
      %435 = vmatpush.msra.mxu0 0.0
      %436 = vmatpush.msra.mxu0 0.0
      %437 = vmatpush.msra.mxu0 0.0
      %438 = vmatpush.msra.mxu0 %v422
      %439 = vmatmul.f32.gmra.mxu0 %v160
      %v440 = vpop.f32.mrf.mxu0
      %v441 = vadd.f32 0.0, %v440
      %442 = vmatmul.f32.gmra.mxu0 %v163
      %v443 = vpop.f32.mrf.mxu0
      %v444 = vadd.f32 0.0, %v443
      %445 = vdwg.mxu0
      %447 = vset.pattern.permute.xlu0 0
      %448 = vperm.xlu0 %447, %v441
      %v449 = vpop.permute.xlu0 %448
      %vm451 = vcmp.gt.f32.partialorder %v77, %v449
      %v452 = vsel %vm451, %v86, 1e+30
      %v453 = vsel %vm95, %v452, inf
      %454 = vmin.xlane.f32.xlu0 %v453
      %v455 = vpop.xlane.xlu0 %454
      %vm456 = vcmp.lt.f32.partialorder %v455, 1e+30
      %v457 = vsel %vm456, %v455, %v149
      %v458 = vadd.f32 %v441, 1.0
      %v459 = vsub.f32 %v458, %v457
      %v460 = vmax.f32 %v459, 0.0
      %v461 = vmul.f32 %v444, %v460
      %v462 = vadd.f32 %v419, %v461
      %vm463 = vcmp.eq.s32.totalorder %v57, 7
      %v464 = vsel %vm463, 1, 0
      %v465 = vcvt.s32.f32 %v464
      %466 = vmatpush.msra.mxu0 0.0
      %467 = vmatpush.msra.mxu0 0.0
      %468 = vmatpush.msra.mxu0 0.0
      %469 = vmatpush.msra.mxu0 0.0
      %470 = vmatpush.msra.mxu0 0.0
      %471 = vmatpush.msra.mxu0 0.0
      %472 = vmatpush.msra.mxu0 0.0
      %473 = vmatpush.msra.mxu0 0.0
      %474 = vmatpush.msra.mxu0 0.0
      %475 = vmatpush.msra.mxu0 0.0
      %476 = vmatpush.msra.mxu0 0.0
      %477 = vmatpush.msra.mxu0 0.0
      %478 = vmatpush.msra.mxu0 0.0
      %479 = vmatpush.msra.mxu0 0.0
      %480 = vmatpush.msra.mxu0 0.0
      %481 = vmatpush.msra.mxu0 %v465
      %482 = vmatmul.f32.gmra.mxu0 %v160
      %v483 = vpop.f32.mrf.mxu0
      %v484 = vadd.f32 0.0, %v483
      %485 = vmatmul.f32.gmra.mxu0 %v163
      %v486 = vpop.f32.mrf.mxu0
      %v487 = vadd.f32 0.0, %v486
      %488 = vdwg.mxu0
      %490 = vset.pattern.permute.xlu0 0
      %491 = vperm.xlu0 %490, %v484
      %v492 = vpop.permute.xlu0 %491
      %vm494 = vcmp.gt.f32.partialorder %v77, %v492
      %v495 = vsel %vm494, %v86, 1e+30
      %v496 = vsel %vm95, %v495, inf
      %497 = vmin.xlane.f32.xlu0 %v496
      %v498 = vpop.xlane.xlu0 %497
      %vm499 = vcmp.lt.f32.partialorder %v498, 1e+30
      %v500 = vsel %vm499, %v498, %v149
      %v501 = vadd.f32 %v484, 1.0
      %v502 = vsub.f32 %v501, %v500
      %v503 = vmax.f32 %v502, 0.0
      %v504 = vmul.f32 %v487, %v503
      %v505 = vadd.f32 %v462, %v504
      %s506 = sld [smem:[#allocation2]]
      %vm507 = vcmask 7168
      %v508 = vsel %vm507, %v505, 0.0
      %509 = vadd.xlane.f32.xlu0 %v508
      %v510 = vpop.xlane.xlu0 %509
      %v511 = vrot.slane %v510, 4
      %v512 = vadd.f32 %v510, %v511
      %v513 = vrot.slane %v512, 2
      %v514 = vadd.f32 %v512, %v513
      %v515 = vrot.slane %v514, 1
      %v516 = vadd.f32 %v514, %v515
      %s517 = vtos %v516
      %s518 = sadd.f32 %s506, %s517
      %519 = sst [smem:[%s150]] %s518
    $region29: #{tpu_custom_call.1} parent=1 // pred_fallthru
      _
    %v520 = vmul.u32 %v57, 128
    %v521 = vadd.s32 %v520, %v61
    %vm522 = vcmp.eq.s32.totalorder %v521, 0
    %s523 = sld [smem:[#allocation2]]
    %v524 = vstv %s523
    %v525 = vsel %vm522, %v524, 0.0
    %vm526 = vcmp.eq.s32.totalorder %v521, 1
    %v527 = vstv %s139
    %v528 = vsel %vm526, %v527, 0.0
    %v529 = vadd.f32 %v525, %v528
    %vm530 = vcmp.eq.s32.totalorder %v521, 2
    %v531 = vstv %s105
    %v532 = vsel %vm530, %v531, 0.0
    %v533 = vadd.f32 %v529, %v532
    %vm534 = vcmp.eq.s32.totalorder %v521, 3
    %v535 = vstv %s116
    %v536 = vsel %vm534, %v535, 0.0
    %v537 = vadd.f32 %v533, %v536
    %vm538 = vcmp.eq.s32.totalorder %v521, 4
    %v539 = vstv %s129
    %v540 = vsel %vm538, %v539, 0.0
    %v541 = vadd.f32 %v537, %v540
    %542 = vst [vmem:[#allocation3] sm:$0xff] %v541
    // Predicated region
    $region30: #{tpu_custom_call.1} parent=1 // pred_check
      _
    $region31: #{tpu_custom_call.1} parent=1 // pred_check_branch
      %544 = sbr.rel (0) target = $region33
    $region32: #{tpu_custom_call.1} parent=1 // pred_region
      %546 = vsyncadd [#allocation4], 0
      %s548 = sshll.u32 [#allocation3], 4
      %s549 = int_to_ptr.vmem [resolvable:$true] %s548
      %s550 = sshll.u32 %s6, 4
      %s551 = int_to_ptr.hbm [resolvable:$true] %s550
      %553 = dma.vmem_to_hbm [thread:$0]  %s549, 128, %s551, [#allocation4]
    $region33: #{tpu_custom_call.1} parent=1 // pred_fallthru
      _
    // Predicated region
    $region34: #{tpu_custom_call.1} parent=1 // pred_check
      _
    $region35: #{tpu_custom_call.1} parent=1 // pred_check_branch
      %555 = sbr.rel (0) target = $region37
    $region36: #{tpu_custom_call.1} parent=1 // pred_region
      %557 = dma.done [#allocation4], 128
    $region37: #{tpu_custom_call.1} parent=1 // pred_fallthru
      _
    %558 = vsyncpa [#allocation4], 1

</llo_original>
